<compile_context>
chip_gen: v7x
topology: tpu7x:2x2x1
jax: 0.10.0
libtpu: 0.0.40
codegen_flags: <defaults>
</compile_context>

<pallas_src>
import math
import itertools
import numpy as np

import jax
import jax.numpy as jnp
from jax.experimental import pallas as pl
from jax.experimental.pallas import tpu as pltpu

# ----- "args" for the module (small, synthetic) ------------------------------
DATASET = "shapenet_3d"   # contains '3d' -> output_dim = 3
SHAPE = "plane"           # grid_dim = 2
NUM_POINTS = 16           # plane grid: n = sqrt(16) = 4 -> 4x4 = 16 points
FEAT = 32                 # codeword feature dim (input x is (B, 1, FEAT))
HIDDEN = 32               # hidden width of the folding MLPs
BATCH = 2

OUTPUT_DIM = 3 if "3d" in DATASET else 2
GRID_DIM = 1 if SHAPE == "1d" else 2

ROW_TILE = 8              # point-rows per grid step (toy size; see TODO above)

# ----- packed parameter slab layout (bf16, single resident DMA) ---------------
LANE = 128
SUB = 16                                  # bf16 sublane tile (keep bias rows aligned)
_HPAD = max(LANE, -(-HIDDEN // LANE) * LANE)
COL2 = _HPAD                              # fold2 half of the merged codeword weight
SLAB_W = 2 * _HPAD                        # lane-dense slab width (multiple of 128)

R_WX = 0                                  # rows [0, FEAT): [w1x | 0 | w2x | 0]
R_W1B = R_WX + FEAT                       # cols [0,H): w1b
R_WFU = R_W1B + HIDDEN                    # cols [0,H): w1c @ w2f (fused)
R_W2B = R_WFU + HIDDEN                    # cols [0,H): w2b
R_W2C = R_W2B + HIDDEN                    # cols [0,OUT): w2c
R_B1B = R_W2C + HIDDEN                    # bias rows, 16-row aligned for bf16 tiles
R_B2A = R_B1B + SUB                       # b2a + b1c @ w2f (fused)
R_B2B = R_B2A + SUB
R_B2C = R_B2B + SUB
SLAB_ROWS = R_B2C + SUB                   # 224 rows x 256 cols bf16 = 112 KiB


def build_grid_plane(num_points):
    """Matches BaseFoldDecoder.build_grid for shape='plane' (channels-last (N, 2))."""
    n = int(math.sqrt(num_points))
    x = np.linspace(0, 1, n)
    y = np.linspace(0, 1, n)
    points = np.array(list(itertools.product(x, y)))  # (N, 2)
    return jnp.asarray(points, dtype=jnp.float32)


# ----- Pallas kernel (one (batch, row-tile) grid step) ------------------------
def fold_kernel(x_ref, pproj_ref, slab_ref, out_ref):
    """x_ref: (1,1,FEAT) bf16 codeword of batch b
       pproj_ref: (TR,H) bf16 tile of points@w1g+b1a
       slab_ref: (SLAB_ROWS, SLAB_W) bf16 packed weights (VMEM-resident)
       out_ref: (1,TR,OUT) f32 output tile."""
    f32, bf16 = jnp.float32, jnp.bfloat16
    H, OUT = HIDDEN, OUTPUT_DIM

    xcw = x_ref[0]                                        # (1, FEAT) bf16
    pproj = pproj_ref[...].astype(f32)                    # (TR, H)

    # static views into the packed slab (weights bf16, biases widened to f32)
    wx = slab_ref[R_WX:R_WX + FEAT, :]                    # (FEAT, SLAB_W)
    w1b = slab_ref[R_W1B:R_W1B + H, 0:H]
    wfu = slab_ref[R_WFU:R_WFU + H, 0:H]                  # w1c @ w2f
    w2b = slab_ref[R_W2B:R_W2B + H, 0:H]
    w2c = slab_ref[R_W2C:R_W2C + H, 0:OUT]
    b1b = slab_ref[R_B1B:R_B1B + 1, 0:H].astype(f32)
    b2a = slab_ref[R_B2A:R_B2A + 1, 0:H].astype(f32)      # b2a + b1c @ w2f
    b2b = slab_ref[R_B2B:R_B2B + 1, 0:H].astype(f32)
    b2c = slab_ref[R_B2C:R_B2C + 1, 0:OUT].astype(f32)

    # Both codeword projections (fold1 & fold2) in a single MXU pass.
    base = jnp.dot(xcw, wx, preferred_element_type=f32)   # (1, SLAB_W)
    base1 = base[:, 0:H]                                  # lane-aligned at 0
    base2 = base[:, COL2:COL2 + H] + b2a                  # lane-aligned at 128

    # fold1 layer1: per-batch codeword row broadcast onto the point tile (VPU).
    h = jnp.maximum(base1 + pproj, 0.0)                                           # (TR, H)
    h = jnp.maximum(jnp.dot(h.astype(bf16), w1b, preferred_element_type=f32) + b1b, 0.0)
    # fold1 layer3 + fold2 layer1 fused via wfu = w1c @ w2f (exact identity)
    h = jnp.maximum(jnp.dot(h.astype(bf16), wfu, preferred_element_type=f32) + base2, 0.0)
    h = jnp.maximum(jnp.dot(h.astype(bf16), w2b, preferred_element_type=f32) + b2b, 0.0)
    f2 = jnp.dot(h.astype(bf16), w2c, preferred_element_type=f32) + b2c           # (TR, OUT)

    out_ref[0] = f2.astype(out_ref.dtype)


@jax.jit
def base_fold_decoder_forward(x, slab, pts_proj):
    """x: (B, 1, FEAT) codeword; returns (B, NUM_POINTS, OUTPUT_DIM) f32."""
    B = x.shape[0]
    N, H = pts_proj.shape
    TR = ROW_TILE
    assert N % TR == 0
    NT = pl.cdiv(N, TR)
    x_b = x.astype(jnp.bfloat16)

    flops = B * NT * (2 * FEAT * SLAB_W + 3 * 2 * TR * H * H + 2 * TR * H * OUTPUT_DIM)
    bytes_accessed = (B * FEAT * 2            # codewords (bf16)
                      + B * N * H * 2         # pproj streamed once per batch (bf16)
                      + SLAB_ROWS * SLAB_W * 2  # resident weight slab (bf16)
                      + B * N * OUTPUT_DIM * 4)  # f32 output

    grid_spec = pltpu.PrefetchScalarGridSpec(
        num_scalar_prefetch=0,
        grid=(B, NT),
        in_specs=[
            pl.BlockSpec((1, 1, FEAT), lambda b, i: (b, 0, 0)),       # codeword of batch b
            pl.BlockSpec((TR, H), lambda b, i: (i, 0)),               # grid-projection tile
            pl.BlockSpec((SLAB_ROWS, SLAB_W), lambda b, i: (0, 0)),   # weights: resident
        ],
        out_specs=pl.BlockSpec((1, TR, OUTPUT_DIM), lambda b, i: (b, i, 0)),
    )
    out = pl.pallas_call(
        fold_kernel,
        out_shape=jax.ShapeDtypeStruct((B, N, OUTPUT_DIM), jnp.float32),
        grid_spec=grid_spec,
        compiler_params=pltpu.CompilerParams(
            dimension_semantics=("parallel", "parallel")),
        cost_estimate=pl.CostEstimate(
            flops=flops, transcendentals=0, bytes_accessed=bytes_accessed),
    )(x_b, pts_proj, slab)
    return out


# ----- deterministic parameter init ------------------------------------------
def init_params(key):
    def dense(key, cin, cout):
        kw, kb = jax.random.split(key)
        scale = 1.0 / math.sqrt(cin)
        w = jax.random.uniform(kw, (cin, cout), jnp.float32, -scale, scale)
        b = jax.random.uniform(kb, (1, cout), jnp.float32, -scale, scale)
        return w, b

    keys = jax.random.split(key, 6)
    # folding1: Conv1d(FEAT+GRID_DIM -> H), Conv1d(H -> H), Conv1d(H -> OUT)
    w1a, b1a = dense(keys[0], FEAT + GRID_DIM, HIDDEN)
    w1b, b1b = dense(keys[1], HIDDEN, HIDDEN)
    w1c, b1c = dense(keys[2], HIDDEN, OUTPUT_DIM)
    # folding2: Conv1d(FEAT+OUT -> H), Conv1d(H -> H), Conv1d(H -> OUT)
    w2a, b2a = dense(keys[3], FEAT + OUTPUT_DIM, HIDDEN)
    w2b, b2b = dense(keys[4], HIDDEN, HIDDEN)
    w2c, b2c = dense(keys[5], HIDDEN, OUTPUT_DIM)

    # split concat-matmuls: cat(x, g) @ W  ==  x @ W[:FEAT] + g @ W[FEAT:]
    w1x, w1g = w1a[:FEAT], w1a[FEAT:]
    w2x, w2f = w2a[:FEAT], w2a[FEAT:]
    return (w1x, w1g, b1a, w1b, b1b, w1c, b1c,
            w2x, w2f, b2a, w2b, b2b, w2c, b2c)


# ----- one-time constant preparation (exact algebraic fusions, then bf16) ------
def prepare_decoder_constants(params, points):
    (w1x, w1g, b1a, w1b, b1b, w1c, b1c,
     w2x, w2f, b2a, w2b, b2b, w2c, b2c) = params
    w_fuse = w1c @ w2f                                # (H, H)  fold1-out fused into fold2-in
    b2a_fused = b2a + b1c @ w2f                       # (1, H)
    pts_proj = points @ w1g + b1a                     # (N, H)  hoisted constant grid proj

    slab = jnp.zeros((SLAB_ROWS, SLAB_W), jnp.float32)
    slab = slab.at[R_WX:R_WX + FEAT, 0:HIDDEN].set(w1x)            # fold1 codeword half
    slab = slab.at[R_WX:R_WX + FEAT, COL2:COL2 + HIDDEN].set(w2x)  # fold2 half @ lane 128
    slab = slab.at[R_W1B:R_W1B + HIDDEN, :HIDDEN].set(w1b)
    slab = slab.at[R_WFU:R_WFU + HIDDEN, :HIDDEN].set(w_fuse)
    slab = slab.at[R_W2B:R_W2B + HIDDEN, :HIDDEN].set(w2b)
    slab = slab.at[R_W2C:R_W2C + HIDDEN, :OUTPUT_DIM].set(w2c)
    slab = slab.at[R_B1B, :HIDDEN].set(b1b[0])
    slab = slab.at[R_B2A, :HIDDEN].set(b2a_fused[0])
    slab = slab.at[R_B2B, :HIDDEN].set(b2b[0])
    slab = slab.at[R_B2C, :OUTPUT_DIM].set(b2c[0])
    return slab.astype(jnp.bfloat16), pts_proj.astype(jnp.bfloat16)


# ----- pure-JAX references -----------------------------------------------------
def reference_forward(x, params, points):
    """Mirrors the PyTorch forward, unfused, full f32."""
    (w1x, w1g, b1a, w1b, b1b, w1c, b1c,
     w2x, w2f, b2a, w2b, b2b, w2c, b2c) = params
    B = x.shape[0]
    xr = jnp.broadcast_to(x[:, 0, :][:, None, :], (B, NUM_POINTS, FEAT))
    pts = jnp.broadcast_to(points[None], (B, NUM_POINTS, GRID_DIM))
    cat1 = jnp.concatenate([xr, pts], axis=-1)
    w1a = jnp.concatenate([w1x, w1g], axis=0)
    h = jax.nn.relu(cat1 @ w1a + b1a)
    h = jax.nn.relu(h @ w1b + b1b)
    f1 = h @ w1c + b1c
    cat2 = jnp.concatenate([xr, f1], axis=-1)
    w2a = jnp.concatenate([w2x, w2f], axis=0)
    h = jax.nn.relu(cat2 @ w2a + b2a)
    h = jax.nn.relu(h @ w2b + b2b)
    f2 = h @ w2c + b2c
    return f2  # (B, N, OUT) == folding_result2.transpose(1, 2)


def matched_reference(x, slab, pproj):
    """Same fused bf16/f32 math as the kernel, in plain JAX (tight check)."""
    bf16, f32 = jnp.bfloat16, jnp.float32
    B = x.shape[0]
    N, H = pproj.shape
    wx = slab[R_WX:R_WX + FEAT, :]
    w1b = slab[R_W1B:R_W1B + H, :H]
    wfu = slab[R_WFU:R_WFU + H, :H]
    w2b = slab[R_W2B:R_W2B + H, :H]
    w2c = slab[R_W2C:R_W2C + H, :OUTPUT_DIM]
    b1b = slab[R_B1B, :H].astype(f32)
    b2a = slab[R_B2A, :H].astype(f32)
    b2b = slab[R_B2B, :H].astype(f32)
    b2c = slab[R_B2C, :OUTPUT_DIM].astype(f32)

    base = jnp.dot(x[:, 0, :].astype(bf16), wx, preferred_element_type=f32)  # (B, SLAB_W)
    base1 = base[:, :H]
    base2 = base[:, COL2:COL2 + H] + b2a
    h = jnp.maximum(base1[:, None, :] + pproj[None].astype(f32), 0.0).reshape(B * N, H)
    h = jnp.maximum(jnp.dot(h.astype(bf16), w1b, preferred_element_type=f32) + b1b, 0.0)
    h = jnp.maximum(jnp.dot(h.astype(bf16), wfu, preferred_element_type=f32)
                    + jnp.repeat(base2, N, axis=0), 0.0)
    h = jnp.maximum(jnp.dot(h.astype(bf16), w2b, preferred_element_type=f32) + b2b, 0.0)
    f2 = jnp.dot(h.astype(bf16), w2c, preferred_element_type=f32) + b2c
    return f2.reshape(B, N, OUTPUT_DIM)


if __name__ == "__main__":
    key = jax.random.PRNGKey(0)
    kx, kp = jax.random.split(key)
    x = jax.random.normal(kx, (BATCH, 1, FEAT), jnp.float32)  # codeword input
    params = init_params(kp)
    points = build_grid_plane(NUM_POINTS)
    slab, pts_proj = prepare_decoder_constants(params, points)

    out = base_fold_decoder_forward(x, slab, pts_proj)
    out = jax.block_until_ready(out)
    assert out.shape == (BATCH, NUM_POINTS, OUTPUT_DIM)

    # Tight check against a bf16-matched reference (same math, plain JAX).
    ref_m = matched_reference(x, slab, pts_proj)
    err_m = float(jnp.max(jnp.abs(out - ref_m)))
    assert err_m < 1e-3, f"mismatch vs bf16-matched reference: {err_m}"

    # Loose check against the full-f32 unfused reference (bf16 MXU numerics).
    ref_f = reference_forward(x, params, points)
    err_f = float(jnp.max(jnp.abs(out - ref_f)))
    assert err_f < 1e-1, f"mismatch vs f32 reference: {err_f}"

    print("KERNEL_OK")
</pallas_src>

<mosaic_0001>
module attributes {stable_mosaic.version = 11 : i64} {
  func.func @fold_kernel(%arg0: i32, %arg1: i32, %arg2: memref<1x1x32xbf16, #tpu.memory_space<vmem>>, %arg3: memref<8x32xbf16, #tpu.memory_space<vmem>>, %arg4: memref<224x256xbf16, #tpu.memory_space<vmem>>, %arg5: memref<1x8x3xf32, #tpu.memory_space<vmem>>) attributes {dimension_semantics = [#tpu.dimension_semantics<parallel>, #tpu.dimension_semantics<parallel>], iteration_bounds = array<i64: 2, 2>, scalar_prefetch = 0 : i64, scratch_operands = 0 : i64, tpu.core_type = #tpu.core_type<tc>, window_params = [{transform_indices = @transform_0, window_bounds = array<i64: 1, 1, 32>}, {transform_indices = @transform_1, window_bounds = array<i64: 8, 32>}, {pipeline_mode = #tpu.pipeline_mode<synchronous>, transform_indices = @transform_2, window_bounds = array<i64: 224, 256>}, {transform_indices = @transform_3, window_bounds = array<i64: 1, 8, 3>}]} {
    %c0 = arith.constant 0 : index
    %c0_0 = arith.constant 0 : index
    %c0_1 = arith.constant 0 : index
    %0 = vector.load %arg2[%c0, %c0_0, %c0_1] : memref<1x1x32xbf16, #tpu.memory_space<vmem>>, vector<1x1x32xbf16>
    %1 = vector.shape_cast %0 : vector<1x1x32xbf16> to vector<1x32xbf16>
    %c0_2 = arith.constant 0 : index
    %c0_3 = arith.constant 0 : index
    %2 = vector.load %arg3[%c0_2, %c0_3] : memref<8x32xbf16, #tpu.memory_space<vmem>>, vector<8x32xbf16>
    %3 = arith.extf %2 : vector<8x32xbf16> to vector<8x32xf32>
    %c0_4 = arith.constant 0 : index
    %c0_5 = arith.constant 0 : index
    %4 = vector.load %arg4[%c0_4, %c0_5] : memref<224x256xbf16, #tpu.memory_space<vmem>>, vector<32x256xbf16>
    %c32 = arith.constant 32 : index
    %c0_6 = arith.constant 0 : index
    %5 = vector.load %arg4[%c32, %c0_6] : memref<224x256xbf16, #tpu.memory_space<vmem>>, vector<32x32xbf16>
    %c64 = arith.constant 64 : index
    %c0_7 = arith.constant 0 : index
    %6 = vector.load %arg4[%c64, %c0_7] : memref<224x256xbf16, #tpu.memory_space<vmem>>, vector<32x32xbf16>
    %c96 = arith.constant 96 : index
    %c0_8 = arith.constant 0 : index
    %7 = vector.load %arg4[%c96, %c0_8] : memref<224x256xbf16, #tpu.memory_space<vmem>>, vector<32x32xbf16>
    %c128 = arith.constant 128 : index
    %c0_9 = arith.constant 0 : index
    %8 = vector.load %arg4[%c128, %c0_9] : memref<224x256xbf16, #tpu.memory_space<vmem>>, vector<32x3xbf16>
    %c160 = arith.constant 160 : index
    %c0_10 = arith.constant 0 : index
    %9 = vector.load %arg4[%c160, %c0_10] : memref<224x256xbf16, #tpu.memory_space<vmem>>, vector<1x32xbf16>
    %10 = arith.extf %9 : vector<1x32xbf16> to vector<1x32xf32>
    %c176 = arith.constant 176 : index
    %c0_11 = arith.constant 0 : index
    %11 = vector.load %arg4[%c176, %c0_11] : memref<224x256xbf16, #tpu.memory_space<vmem>>, vector<1x32xbf16>
    %12 = arith.extf %11 : vector<1x32xbf16> to vector<1x32xf32>
    %c192 = arith.constant 192 : index
    %c0_12 = arith.constant 0 : index
    %13 = vector.load %arg4[%c192, %c0_12] : memref<224x256xbf16, #tpu.memory_space<vmem>>, vector<1x32xbf16>
    %14 = arith.extf %13 : vector<1x32xbf16> to vector<1x32xf32>
    %c208 = arith.constant 208 : index
    %c0_13 = arith.constant 0 : index
    %15 = vector.load %arg4[%c208, %c0_13] : memref<224x256xbf16, #tpu.memory_space<vmem>>, vector<1x3xbf16>
    %16 = arith.extf %15 : vector<1x3xbf16> to vector<1x3xf32>
    %cst = arith.constant dense<0.000000e+00> : vector<1x256xf32>
    %17 = tpu.matmul %1, %4, %cst {dimension_numbers = #tpu.dot_dimension_numbers<[1], [0], [0], [1], [0, 0, 1, 1], [], []>} : vector<1x32xbf16>, vector<32x256xbf16>, vector<1x256xf32> -> vector<1x256xf32>
    %18 = vector.extract_strided_slice %17 {offsets = [0, 0], sizes = [1, 32], strides = [1, 1]} : vector<1x256xf32> to vector<1x32xf32>
    %19 = vector.extract_strided_slice %17 {offsets = [0, 128], sizes = [1, 32], strides = [1, 1]} : vector<1x256xf32> to vector<1x32xf32>
    %20 = arith.addf %19, %12 : vector<1x32xf32>
    %21 = vector.broadcast %18 : vector<1x32xf32> to vector<8x32xf32>
    %22 = arith.addf %21, %3 : vector<8x32xf32>
    %cst_14 = arith.constant 0.000000e+00 : f32
    %23 = vector.broadcast %cst_14 : f32 to vector<8x32xf32>
    %24 = arith.maximumf %22, %23 : vector<8x32xf32>
    %25 = arith.truncf %24 : vector<8x32xf32> to vector<8x32xbf16>
    %cst_15 = arith.constant dense<0.000000e+00> : vector<8x32xf32>
    %26 = tpu.matmul %25, %5, %cst_15 {dimension_numbers = #tpu.dot_dimension_numbers<[1], [0], [0], [1], [0, 0, 1, 1], [], []>} : vector<8x32xbf16>, vector<32x32xbf16>, vector<8x32xf32> -> vector<8x32xf32>
    %27 = vector.broadcast %10 : vector<1x32xf32> to vector<8x32xf32>
    %28 = arith.addf %26, %27 : vector<8x32xf32>
    %cst_16 = arith.constant 0.000000e+00 : f32
    %29 = vector.broadcast %cst_16 : f32 to vector<8x32xf32>
    %30 = arith.maximumf %28, %29 : vector<8x32xf32>
    %31 = arith.truncf %30 : vector<8x32xf32> to vector<8x32xbf16>
    %cst_17 = arith.constant dense<0.000000e+00> : vector<8x32xf32>
    %32 = tpu.matmul %31, %6, %cst_17 {dimension_numbers = #tpu.dot_dimension_numbers<[1], [0], [0], [1], [0, 0, 1, 1], [], []>} : vector<8x32xbf16>, vector<32x32xbf16>, vector<8x32xf32> -> vector<8x32xf32>
    %33 = vector.broadcast %20 : vector<1x32xf32> to vector<8x32xf32>
    %34 = arith.addf %32, %33 : vector<8x32xf32>
    %cst_18 = arith.constant 0.000000e+00 : f32
    %35 = vector.broadcast %cst_18 : f32 to vector<8x32xf32>
    %36 = arith.maximumf %34, %35 : vector<8x32xf32>
    %37 = arith.truncf %36 : vector<8x32xf32> to vector<8x32xbf16>
    %cst_19 = arith.constant dense<0.000000e+00> : vector<8x32xf32>
    %38 = tpu.matmul %37, %7, %cst_19 {dimension_numbers = #tpu.dot_dimension_numbers<[1], [0], [0], [1], [0, 0, 1, 1], [], []>} : vector<8x32xbf16>, vector<32x32xbf16>, vector<8x32xf32> -> vector<8x32xf32>
    %39 = vector.broadcast %14 : vector<1x32xf32> to vector<8x32xf32>
    %40 = arith.addf %38, %39 : vector<8x32xf32>
    %cst_20 = arith.constant 0.000000e+00 : f32
    %41 = vector.broadcast %cst_20 : f32 to vector<8x32xf32>
    %42 = arith.maximumf %40, %41 : vector<8x32xf32>
    %43 = arith.truncf %42 : vector<8x32xf32> to vector<8x32xbf16>
    %cst_21 = arith.constant dense<0.000000e+00> : vector<8x3xf32>
    %44 = tpu.matmul %43, %8, %cst_21 {dimension_numbers = #tpu.dot_dimension_numbers<[1], [0], [0], [1], [0, 0, 1, 1], [], []>} : vector<8x32xbf16>, vector<32x3xbf16>, vector<8x3xf32> -> vector<8x3xf32>
    %45 = vector.broadcast %16 : vector<1x3xf32> to vector<8x3xf32>
    %46 = arith.addf %44, %45 : vector<8x3xf32>
    %c0_22 = arith.constant 0 : index
    %c0_23 = arith.constant 0 : index
    %c0_24 = arith.constant 0 : index
    %47 = vector.load %arg5[%c0_22, %c0_23, %c0_24] : memref<1x8x3xf32, #tpu.memory_space<vmem>>, vector<1x8x3xf32>
    %48 = vector.shape_cast %47 : vector<1x8x3xf32> to vector<8x3xf32>
    %49 = vector.shape_cast %46 : vector<8x3xf32> to vector<1x8x3xf32>
    tpu.vector_store %arg5[%c0_22, %c0_23, %c0_24], %49 {strides = array<i32>} : memref<1x8x3xf32, #tpu.memory_space<vmem>>, vector<1x8x3xf32>,
    return
  }
  func.func @transform_0(%arg0: i32, %arg1: i32) -> (i32, i32, i32) {
    %c0_i32 = arith.constant 0 : i32
    %c0_i32_0 = arith.constant 0 : i32
    %c0_i32_1 = arith.constant 0 : i32
    return %arg0, %c0_i32, %c0_i32_0 : i32, i32, i32
  }
  func.func @transform_1(%arg0: i32, %arg1: i32) -> (i32, i32) {
    %c0_i32 = arith.constant 0 : i32
    %c0_i32_0 = arith.constant 0 : i32
    return %arg1, %c0_i32 : i32, i32
  }
  func.func @transform_2(%arg0: i32, %arg1: i32) -> (i32, i32) {
    %c0_i32 = arith.constant 0 : i32
    %c0_i32_0 = arith.constant 0 : i32
    %c0_i32_1 = arith.constant 0 : i32
    return %c0_i32, %c0_i32_0 : i32, i32
  }
  func.func @transform_3(%arg0: i32, %arg1: i32) -> (i32, i32, i32) {
    %c0_i32 = arith.constant 0 : i32
    %c0_i32_0 = arith.constant 0 : i32
    return %arg0, %arg1, %c0_i32 : i32, i32, i32
  }
}

</mosaic_0001>

<llo_original>
// kernel: base_fold_decoder_forward.1
$region0: #{base_fold_decoder_forward.1}
  #allocation0 [shape = 'u32[]', space=smem, size = 0x4, offset = 0x4, fixed_abs, tag = 'smem constant byte address 0x4 - core index']
  #allocation1 [shape = 'u32[144,128]{1,0:T(1,128)}', space=vmem, size = 0x12000, scoped, tag = 'internal scratch']
  %s0 = inlined_call_operand.vmem [shape: bf16[2,1,32], index: 0, kind: input, shape index: {}]
  %s1 = inlined_call_operand.vmem [shape: bf16[16,32], index: 1, kind: input, shape index: {}]
  %s2 = inlined_call_operand.hbm [shape: bf16[224,256], index: 2, kind: input, shape index: {}]
  %s3 = inlined_call_operand.vmem [shape: f32[2,16,3], index: 3, kind: output, shape index: {}]
  %s4 = sld [smem:[#allocation0]]
  $region49: #{base_fold_decoder_forward.1} parent=0
    _
  %s6 = ssub.s32 1, %s4
  %s7 = scalar_select 0, %s6, %s4
  $region1: #{base_fold_decoder_forward.1} parent=0
    #allocation2 [shape = 'u8[114688]{0}', space=vmem, size = 0x1c000, scoped, tag = 'input window, operand 2, single buffered']
    #allocation3 [shape = 's32[2]{0}', space=sflag, size = 0x8, scoped, tag = 'scoped memory for base_fold_decoder_forward.1']
    %8 = vsyncpa [#allocation3], 0
    loop: start=0, step=1, limit=6
    $region2: #{base_fold_decoder_forward.1} parent=1 // loop_pre_header
      _
    $region3: #{base_fold_decoder_forward.1} parent=1 // loop_header
      %s10 = sphi 0, %s14
      %p11 = scmp.ge.s32.totalorder %s10, 6
      %s17 = sphi 0, %s29
      %s18 = sphi 0, %s25
      %s19 = sphi 0, %s17
      %s20 = sphi 0, %s18
      %s21 = sphi 0, %s19
      %s22 = sphi 0, %s20
      %s32 = sphi 0, %s34
      %s35 = sphi 0, %s32
      %s36 = sphi 0, %s35
      %s52 = sphi 0, %s36
      %s58 = sphi 0, %s60
      %s61 = sphi 0, %s58
      %s62 = sphi 0, %s61
      %s78 = sphi 0, %s62
      %s82 = sphi 0, %s82
      %s84 = sphi 0, %s82
      %s85 = sphi 0, %s84
      %s99 = sphi 0, %s85
      %s107 = sphi 0, %s109
      %s110 = sphi 0, %s107
      %s111 = sphi 0, %s110
      %s127 = sphi 0, %s111
    $region4: #{base_fold_decoder_forward.1} parent=1 // loop_header_branch
      %13 = sbr.rel (%p11) target = $region8
    $region5: #{base_fold_decoder_forward.1} parent=1 // loop_body
      %s15 = ssub.s32 %s10, 1
      %s16 = ssub.s32 %s10, 2
      %s23 = sadd.s32 1, %s18
      %p24 = scmp.ge.s32.totalorder %s23, 2
      %s25 = scalar_select %p24, 0, %s23
      %s26 = sadd.s32 1, %s17
      %s27 = scalar_select %p24, %s26, %s17
      %p28 = scmp.ge.s32.totalorder %s27, 2
      %s29 = scalar_select %p28, 0, %s27
      %s30 = ssub.s32 %s17, %s29
      %p31 = scmp.eq.s32.totalorder %s30, 0
      %s33 = sadd.s32 %s32, 1
      %s34 = scalar_select %p31, %s32, %s33
      %p37 = pneg %p31
      %p38 = scmp.eq.s32.totalorder %s10, 3
      %p39 = por %p37, %p38
      %p40 = scmp.ne.s32.totalorder %s32, %s35
      %p41 = scmp.eq.s32.totalorder %s10, 0
      %p42 = por %p40, %p41
      %p43 = scmp.ne.s32.totalorder %s32, %s35
      %p44 = scmp.eq.s32.totalorder %s15, 3
      %p45 = por %p43, %p44
      %p46 = scmp.ne.s32.totalorder %s35, %s36
      %p47 = scmp.eq.s32.totalorder %s15, 0
      %p48 = por %p46, %p47
      %p49 = scmp.ne.s32.totalorder %s35, %s36
      %p50 = scmp.eq.s32.totalorder %s16, 3
      %p51 = por %p49, %p50
      %p53 = scmp.ne.s32.totalorder %s36, %s52
      %p54 = scmp.eq.s32.totalorder %s16, 0
      %p55 = por %p53, %p54
      %s56 = ssub.s32 %s18, %s25
      %p57 = scmp.eq.s32.totalorder %s56, 0
      %s59 = sadd.s32 %s58, 1
      %s60 = scalar_select %p57, %s58, %s59
      %p63 = pneg %p57
      %p64 = scmp.eq.s32.totalorder %s10, 3
      %p65 = por %p63, %p64
      %p66 = scmp.ne.s32.totalorder %s58, %s61
      %p67 = scmp.eq.s32.totalorder %s10, 0
      %p68 = por %p66, %p67
      %p69 = scmp.ne.s32.totalorder %s58, %s61
      %p70 = scmp.eq.s32.totalorder %s15, 3
      %p71 = por %p69, %p70
      %p72 = scmp.ne.s32.totalorder %s61, %s62
      %p73 = scmp.eq.s32.totalorder %s15, 0
      %p74 = por %p72, %p73
      %p75 = scmp.ne.s32.totalorder %s61, %s62
      %p76 = scmp.eq.s32.totalorder %s16, 3
      %p77 = por %p75, %p76
      %p79 = scmp.ne.s32.totalorder %s62, %s78
      %p80 = scmp.eq.s32.totalorder %s16, 0
      %p81 = por %p79, %p80
      %s83 = sadd.s32 %s82, 1
      %p86 = scmp.eq.s32.totalorder %s10, 3
      %p87 = scmp.ne.s32.totalorder %s82, %s84
      %p88 = scmp.eq.s32.totalorder %s10, 0
      %p89 = por %p87, %p88
      %p90 = scmp.ne.s32.totalorder %s82, %s84
      %p91 = scmp.eq.s32.totalorder %s15, 3
      %p92 = por %p90, %p91
      %p93 = scmp.ne.s32.totalorder %s84, %s85
      %p94 = scmp.eq.s32.totalorder %s15, 0
      %p95 = por %p93, %p94
      %p96 = scmp.ne.s32.totalorder %s84, %s85
      %p97 = scmp.eq.s32.totalorder %s16, 3
      %p98 = por %p96, %p97
      %p100 = scmp.ne.s32.totalorder %s85, %s99
      %p101 = scmp.eq.s32.totalorder %s16, 0
      %p102 = por %p100, %p101
      %s103 = ssub.s32 %s17, %s29
      %s104 = ssub.s32 %s18, %s25
      %s105 = sor.u32 %s103, %s104
      %p106 = scmp.eq.s32.totalorder %s105, 0
      %s108 = sadd.s32 %s107, 1
      %s109 = scalar_select %p106, %s107, %s108
      %p112 = pneg %p106
      %p113 = scmp.eq.s32.totalorder %s10, 3
      %p114 = por %p112, %p113
      %p115 = scmp.ne.s32.totalorder %s107, %s110
      %p116 = scmp.eq.s32.totalorder %s10, 0
      %p117 = por %p115, %p116
      %p118 = scmp.ne.s32.totalorder %s107, %s110
      %p119 = scmp.eq.s32.totalorder %s15, 3
      %p120 = por %p118, %p119
      %p121 = scmp.ne.s32.totalorder %s110, %s111
      %p122 = scmp.eq.s32.totalorder %s15, 0
      %p123 = por %p121, %p122
      %p124 = scmp.ne.s32.totalorder %s110, %s111
      %p125 = scmp.eq.s32.totalorder %s16, 3
      %p126 = por %p124, %p125
      %p128 = scmp.ne.s32.totalorder %s111, %s127
      %p129 = scmp.eq.s32.totalorder %s16, 0
      %p130 = por %p128, %p129
      %p131 = scmp.le.s32.totalorder 1, %s10
      %p132 = scmp.lt.s32.totalorder %s10, 5
      %p133 = pnand %p131, %p132
      %p134 = pneg %p133
      // Predicated region
      $region9: #{base_fold_decoder_forward.1} parent=5 // pred_check
        _
      $region10: #{base_fold_decoder_forward.1} parent=5 // pred_check_branch
        %136 = sbr.rel (%p133) target = $region12
      $region11: #{base_fold_decoder_forward.1} parent=5 // pred_region
        %s137 = ssub.s32 %s10, 1
        // Predicated region
        $region13: #{base_fold_decoder_forward.1} parent=11 // pred_check
          %p138 = pneg %p95
        $region14: #{base_fold_decoder_forward.1} parent=11 // pred_check_branch
          %140 = sbr.rel (%p138) target = $region16
        $region15: #{base_fold_decoder_forward.1} parent=11 // pred_region
          %s142 = ssub.s32 3584, 3584
          %143 = vsyncadd [#allocation3], %s142
          %s144 = sshll.u32 [#allocation2], 4
          %s145 = int_to_ptr.vmem [resolvable:$true] %s144
          %150 = dma.hbm_to_vmem [thread:$0]  %s2, 3584, %s145, [#allocation3], 128, 128, 8
        $region16: #{base_fold_decoder_forward.1} parent=11 // pred_fallthru
          _
      $region12: #{base_fold_decoder_forward.1} parent=5 // pred_fallthru
        _
      %p151 = scmp.lt.s32.totalorder %s10, 4
      // Predicated region
      $region17: #{base_fold_decoder_forward.1} parent=5 // pred_check
        %p152 = pneg %p151
      $region18: #{base_fold_decoder_forward.1} parent=5 // pred_check_branch
        %154 = sbr.rel (%p152) target = $region20
      $region19: #{base_fold_decoder_forward.1} parent=5 // pred_region
        // Predicated region
        $region21: #{base_fold_decoder_forward.1} parent=19 // pred_check
          %p155 = pneg %p42
        $region22: #{base_fold_decoder_forward.1} parent=19 // pred_check_branch
          %157 = sbr.rel (%p155) target = $region24
        $region23: #{base_fold_decoder_forward.1} parent=19 // pred_region
          %p158 = scmp.lt.s32.totalorder %s17, 1
          %s159 = scalar_select %p158, %s17, 1
          %s160 = scalar_lea.vmem %s0, %s159
        $region24: #{base_fold_decoder_forward.1} parent=19 // pred_fallthru
          _
        // Predicated region
        $region25: #{base_fold_decoder_forward.1} parent=19 // pred_check
          %p161 = pneg %p68
        $region26: #{base_fold_decoder_forward.1} parent=19 // pred_check_branch
          %163 = sbr.rel (%p161) target = $region28
        $region27: #{base_fold_decoder_forward.1} parent=19 // pred_region
          %p164 = scmp.lt.s32.totalorder %s18, 1
          %s165 = scalar_select %p164, %s18, 1
          %s166 = smul.addr %s165, 4
          %s167 = scalar_lea.vmem %s1, %s166
        $region28: #{base_fold_decoder_forward.1} parent=19 // pred_fallthru
          _
      $region20: #{base_fold_decoder_forward.1} parent=5 // pred_fallthru
        _
      %p168 = scmp.le.s32.totalorder 1, %s10
      %p169 = scmp.lt.s32.totalorder %s10, 5
      %p170 = pnand %p168, %p169
      %p171 = pneg %p170
      // Predicated region
      $region29: #{base_fold_decoder_forward.1} parent=5 // pred_check
        _
      $region30: #{base_fold_decoder_forward.1} parent=5 // pred_check_branch
        %173 = sbr.rel (%p170) target = $region32
      $region31: #{base_fold_decoder_forward.1} parent=5 // pred_region
        %s174 = ssub.s32 %s10, 1
        // Predicated region
        $region33: #{base_fold_decoder_forward.1} parent=31 // pred_check
          %p175 = pneg %p95
        $region34: #{base_fold_decoder_forward.1} parent=31 // pred_check_branch
          %177 = sbr.rel (%p175) target = $region36
        $region35: #{base_fold_decoder_forward.1} parent=31 // pred_region
          %178 = dma.done [#allocation3], 3584
        $region36: #{base_fold_decoder_forward.1} parent=31 // pred_fallthru
          _
        %p179 = scmp.lt.s32.totalorder %s19, 1
        %s180 = scalar_select %p179, %s19, 1
        %s181 = scalar_lea.vmem %s0, %s180
        %p182 = pneg %p48
        %p183 = pneg %p45
        %p184 = scmp.lt.s32.totalorder %s20, 1
        %s185 = scalar_select %p184, %s20, 1
        %s186 = smul.addr %s185, 4
        %s187 = scalar_lea.vmem %s1, %s186
        %p188 = pneg %p74
        %p189 = pneg %p71
        %p190 = pneg %p95
        %p191 = pneg %p92
        %p192 = pneg %p123
        %p193 = pneg %p120
        %p194 = scmp.lt.s32.totalorder %s19, 1
        %s195 = scalar_select %p194, %s19, 1
        %p196 = scmp.lt.s32.totalorder %s20, 1
        %s197 = scalar_select %p196, %s20, 1
        %s198 = smul.addr %s195, 2
        %s199 = sadd.s32 %s197, %s198
        %s200 = smul.addr %s199, 8
        %s201 = scalar_lea.vmem %s3, %s200
        %p202 = scmp.lt.s32.totalorder %s19, 1
        %s203 = scalar_select %p202, %s19, 1
        %s204 = scalar_lea.vmem %s0, %s203
        %p205 = scmp.lt.s32.totalorder %s20, 1
        %s206 = scalar_select %p205, %s20, 1
        %s207 = smul.addr %s206, 4
        %s208 = scalar_lea.vmem %s1, %s207
        %p209 = scmp.lt.s32.totalorder %s19, 1
        %s210 = scalar_select %p209, %s19, 1
        %p211 = scmp.lt.s32.totalorder %s20, 1
        %s212 = scalar_select %p211, %s20, 1
        %s213 = smul.addr %s210, 2
        %s214 = sadd.s32 %s212, %s213
        %s215 = smul.addr %s214, 8
        %s216 = scalar_lea.vmem %s3, %s215
        %v218 = vld [vmem:[%s204] sm:$0x1]
        %v219 = vld [vmem:[%s208] sm:$0xf]
        %v220 = vunpack.c.l.bf16 %v219
        %v221 = vld [vmem:[#allocation2] sm:$0xff]
        %v222 = vld [vmem:[#allocation2 + $0x8] sm:$0xff]
        %v223 = vld [vmem:[#allocation2 + $0x10] sm:$0xff]
        %v224 = vld [vmem:[#allocation2 + $0x18] sm:$0xff]
        %v225 = vld [vmem:[#allocation2 + $0x20] sm:$0xf]
        %v226 = vld [vmem:[#allocation2 + $0x28] sm:$0xf]
        %v227 = vld [vmem:[#allocation2 + $0x30] sm:$0xf]
        %v228 = vld [vmem:[#allocation2 + $0x38] sm:$0xf]
        %v229 = vld [vmem:[#allocation2 + $0x40] sm:$0xf]
        %v230 = vld [vmem:[#allocation2 + $0x48] sm:$0xf]
        %v231 = vld [vmem:[#allocation2 + $0x50] sm:$0xf]
        %v232 = vld [vmem:[#allocation2 + $0x58] sm:$0xf]
        %v233 = vld [vmem:[#allocation2 + $0x60] sm:$0xf]
        %v234 = vld [vmem:[#allocation2 + $0x68] sm:$0xf]
        %v235 = vld [vmem:[#allocation2 + $0x70] sm:$0xf]
        %v236 = vld [vmem:[#allocation2 + $0x78] sm:$0xf]
        %v237 = vld [vmem:[#allocation2 + $0x80] sm:$0xf]
        %v238 = vld [vmem:[#allocation2 + $0x88] sm:$0xf]
        %v239 = vld [vmem:[#allocation2 + $0x90] sm:$0xf]
        %v240 = vld [vmem:[#allocation2 + $0x98] sm:$0xf]
        %v241 = vld [vmem:[#allocation2 + $0xa0] sm:$0x1]
        %v242 = vunpack.c.l.bf16 %v241
        %v243 = vld [vmem:[#allocation2 + $0xb0] sm:$0x1]
        %v244 = vunpack.c.l.bf16 %v243
        %v245 = vld [vmem:[#allocation2 + $0xc0] sm:$0x1]
        %v246 = vunpack.c.l.bf16 %v245
        %v247 = vld [vmem:[#allocation2 + $0xd0] sm:$0x1]
        %v248 = vunpack.c.l.bf16 %v247
        %v253 = vunpack.c.l.b16 %v221
        %v254 = vunpack.c.h.b16 %v221
        %v255 = vunpack.c.l.b16 %v222
        %v256 = vunpack.c.h.b16 %v222
        %v257 = vunpack.c.l.b16 %v223
        %v258 = vunpack.c.h.b16 %v223
        %v259 = vunpack.c.l.b16 %v224
        %v260 = vunpack.c.h.b16 %v224
        %v261 = vpack.c.b16 %v255, %v253
        %v262 = vpack.c.b16 %v256, %v254
        %v263 = vpack.c.b16 %v259, %v257
        %v264 = vpack.c.b16 %v260, %v258
        %vm269 = vcmask 261120
        %v271 = vsel %vm269, %v218, 0
        %273 = vmatprep.subr.bf16.mxu0 %v262
        %274 = vmatpush1.bf16.msra.mxu0 %v261
        %275 = vmatprep.subr.bf16.mxu0 %v264
        %276 = vmatpush1.bf16.msra.mxu0 %v263
        %277 = vmatprep.subr.bf16.mxu0 0
        %278 = vmatpush1.bf16.msra.mxu0 0
        %279 = vmatprep.subr.bf16.mxu0 0
        %280 = vmatpush1.bf16.msra.mxu0 0
        %281 = vmatprep.subr.bf16.mxu0 0
        %282 = vmatpush1.bf16.msra.mxu0 0
        %283 = vmatprep.subr.bf16.mxu0 0
        %284 = vmatpush1.bf16.msra.mxu0 0
        %285 = vmatprep.subr.bf16.mxu0 0
        %286 = vmatpush1.bf16.msra.mxu0 0
        %287 = vmatprep.subr.bf16.mxu0 0
        %288 = vmatpush1.bf16.msra.mxu0 0
        %289 = vmatprep.subr.bf16.mxu0 0
        %290 = vmatpush1.bf16.msra.mxu0 0
        %291 = vmatprep.subr.bf16.mxu0 0
        %292 = vmatpush1.bf16.msra.mxu0 0
        %293 = vmatprep.subr.bf16.mxu0 0
        %294 = vmatpush1.bf16.msra.mxu0 0
        %295 = vmatprep.subr.bf16.mxu0 0
        %296 = vmatpush1.bf16.msra.mxu0 0
        %297 = vmatprep.subr.bf16.mxu0 0
        %298 = vmatpush1.bf16.msra.mxu0 0
        %299 = vmatprep.subr.bf16.mxu0 0
        %300 = vmatpush1.bf16.msra.mxu0 0
        %301 = vmatprep.subr.bf16.mxu0 0
        %302 = vmatpush1.bf16.msra.mxu0 0
        %303 = vmatprep.subr.bf16.mxu0 0
        %304 = vmatpush1.bf16.msra.mxu0 0
        %305 = vmatprep.mubr.bf16.mxu0 0
        %306 = vmatmul.mubr.bf16.gmra.mrb[0].mxu0 %v271
        %v307 = vpop.f32.mrb[0].mxu0
        %v308 = vadd.f32 0.0, %v307
        %v309 = vpop.f32.mrb[0].mxu0
        %v310 = vadd.f32 0.0, %v309
        %v311 = vpop.f32.mrb[0].mxu0
        %v312 = vpop.f32.mrb[0].mxu0
        %313 = vdwg.mxu0
        %v314 = vadd.f32 %v310, %v244
        %v315 = vlaneseq
        %v316 = vshrl.u32 %v315, 7
        %v317 = vsub.s32 0, %v316
        %v318 = vrot.slane %v308, %v317
        %v319 = vadd.f32 %v318, %v220
        %v320 = vmax.f32 %v319, 0.0
        %v321 = vpack.c.bf16 %v320, %v320
        %v322 = vlaneseq
        %v323 = vshrl.u32 %v322, 7
        %v324 = vsub.s32 0, %v323
        %v325 = vrot.slane %v242, %v324
        %v330 = vunpack.c.l.b16 %v225
        %v331 = vunpack.c.l.b16 %v226
        %v332 = vunpack.c.l.b16 %v227
        %v333 = vunpack.c.l.b16 %v228
        %v334 = vpack.c.b16 %v331, %v330
        %v335 = vpack.c.b16 %v333, %v332
        %v339 = vsel %vm269, %v321, 0
        %341 = vmatprep.subr.bf16.mxu0 0
        %342 = vmatpush1.bf16.msra.mxu0 %v334
        %343 = vmatprep.subr.bf16.mxu0 0
        %344 = vmatpush1.bf16.msra.mxu0 %v335
        %345 = vmatprep.subr.bf16.mxu0 0
        %346 = vmatpush1.bf16.msra.mxu0 0
        %347 = vmatprep.subr.bf16.mxu0 0
        %348 = vmatpush1.bf16.msra.mxu0 0
        %349 = vmatprep.subr.bf16.mxu0 0
        %350 = vmatpush1.bf16.msra.mxu0 0
        %351 = vmatprep.subr.bf16.mxu0 0
        %352 = vmatpush1.bf16.msra.mxu0 0
        %353 = vmatprep.subr.bf16.mxu0 0
        %354 = vmatpush1.bf16.msra.mxu0 0
        %355 = vmatprep.subr.bf16.mxu0 0
        %356 = vmatpush1.bf16.msra.mxu0 0
        %357 = vmatprep.subr.bf16.mxu0 0
        %358 = vmatpush1.bf16.msra.mxu0 0
        %359 = vmatprep.subr.bf16.mxu0 0
        %360 = vmatpush1.bf16.msra.mxu0 0
        %361 = vmatprep.subr.bf16.mxu0 0
        %362 = vmatpush1.bf16.msra.mxu0 0
        %363 = vmatprep.subr.bf16.mxu0 0
        %364 = vmatpush1.bf16.msra.mxu0 0
        %365 = vmatprep.subr.bf16.mxu0 0
        %366 = vmatpush1.bf16.msra.mxu0 0
        %367 = vmatprep.subr.bf16.mxu0 0
        %368 = vmatpush1.bf16.msra.mxu0 0
        %369 = vmatprep.subr.bf16.mxu0 0
        %370 = vmatpush1.bf16.msra.mxu0 0
        %371 = vmatprep.subr.bf16.mxu0 0
        %372 = vmatpush1.bf16.msra.mxu0 0
        %373 = vmatprep.mubr.bf16.mxu0 0
        %374 = vmatmul.mubr.bf16.gmra.mrb[0].mxu0 %v339
        %v375 = vpop.f32.mrb[0].mxu0
        %v376 = vadd.f32 %v325, %v375
        %v377 = vpop.f32.mrb[0].mxu0
        %v378 = vpop.f32.mrb[0].mxu0
        %v379 = vpop.f32.mrb[0].mxu0
        %380 = vdwg.mxu0
        %v381 = vmax.f32 %v376, 0.0
        %v382 = vpack.c.bf16 %v381, %v381
        %v383 = vlaneseq
        %v384 = vshrl.u32 %v383, 7
        %v385 = vsub.s32 0, %v384
        %v386 = vrot.slane %v314, %v385
        %v391 = vunpack.c.l.b16 %v229
        %v392 = vunpack.c.l.b16 %v230
        %v393 = vunpack.c.l.b16 %v231
        %v394 = vunpack.c.l.b16 %v232
        %v395 = vpack.c.b16 %v392, %v391
        %v396 = vpack.c.b16 %v394, %v393
        %v400 = vsel %vm269, %v382, 0
        %402 = vmatprep.subr.bf16.mxu0 0
        %403 = vmatpush1.bf16.msra.mxu0 %v395
        %404 = vmatprep.subr.bf16.mxu0 0
        %405 = vmatpush1.bf16.msra.mxu0 %v396
        %406 = vmatprep.subr.bf16.mxu0 0
        %407 = vmatpush1.bf16.msra.mxu0 0
        %408 = vmatprep.subr.bf16.mxu0 0
        %409 = vmatpush1.bf16.msra.mxu0 0
        %410 = vmatprep.subr.bf16.mxu0 0
        %411 = vmatpush1.bf16.msra.mxu0 0
        %412 = vmatprep.subr.bf16.mxu0 0
        %413 = vmatpush1.bf16.msra.mxu0 0
        %414 = vmatprep.subr.bf16.mxu0 0
        %415 = vmatpush1.bf16.msra.mxu0 0
        %416 = vmatprep.subr.bf16.mxu0 0
        %417 = vmatpush1.bf16.msra.mxu0 0
        %418 = vmatprep.subr.bf16.mxu0 0
        %419 = vmatpush1.bf16.msra.mxu0 0
        %420 = vmatprep.subr.bf16.mxu0 0
        %421 = vmatpush1.bf16.msra.mxu0 0
        %422 = vmatprep.subr.bf16.mxu0 0
        %423 = vmatpush1.bf16.msra.mxu0 0
        %424 = vmatprep.subr.bf16.mxu0 0
        %425 = vmatpush1.bf16.msra.mxu0 0
        %426 = vmatprep.subr.bf16.mxu0 0
        %427 = vmatpush1.bf16.msra.mxu0 0
        %428 = vmatprep.subr.bf16.mxu0 0
        %429 = vmatpush1.bf16.msra.mxu0 0
        %430 = vmatprep.subr.bf16.mxu0 0
        %431 = vmatpush1.bf16.msra.mxu0 0
        %432 = vmatprep.subr.bf16.mxu0 0
        %433 = vmatpush1.bf16.msra.mxu0 0
        %434 = vmatprep.mubr.bf16.mxu0 0
        %435 = vmatmul.mubr.bf16.gmra.mrb[0].mxu0 %v400
        %v436 = vpop.f32.mrb[0].mxu0
        %v437 = vadd.f32 %v386, %v436
        %v438 = vpop.f32.mrb[0].mxu0
        %v439 = vpop.f32.mrb[0].mxu0
        %v440 = vpop.f32.mrb[0].mxu0
        %441 = vdwg.mxu0
        %v442 = vmax.f32 %v437, 0.0
        %v443 = vpack.c.bf16 %v442, %v442
        %v444 = vlaneseq
        %v445 = vshrl.u32 %v444, 7
        %v446 = vsub.s32 0, %v445
        %v447 = vrot.slane %v246, %v446
        %v452 = vunpack.c.l.b16 %v233
        %v453 = vunpack.c.l.b16 %v234
        %v454 = vunpack.c.l.b16 %v235
        %v455 = vunpack.c.l.b16 %v236
        %v456 = vpack.c.b16 %v453, %v452
        %v457 = vpack.c.b16 %v455, %v454
        %v461 = vsel %vm269, %v443, 0
        %463 = vmatprep.subr.bf16.mxu0 0
        %464 = vmatpush1.bf16.msra.mxu0 %v456
        %465 = vmatprep.subr.bf16.mxu0 0
        %466 = vmatpush1.bf16.msra.mxu0 %v457
        %467 = vmatprep.subr.bf16.mxu0 0
        %468 = vmatpush1.bf16.msra.mxu0 0
        %469 = vmatprep.subr.bf16.mxu0 0
        %470 = vmatpush1.bf16.msra.mxu0 0
        %471 = vmatprep.subr.bf16.mxu0 0
        %472 = vmatpush1.bf16.msra.mxu0 0
        %473 = vmatprep.subr.bf16.mxu0 0
        %474 = vmatpush1.bf16.msra.mxu0 0
        %475 = vmatprep.subr.bf16.mxu0 0
        %476 = vmatpush1.bf16.msra.mxu0 0
        %477 = vmatprep.subr.bf16.mxu0 0
        %478 = vmatpush1.bf16.msra.mxu0 0
        %479 = vmatprep.subr.bf16.mxu0 0
        %480 = vmatpush1.bf16.msra.mxu0 0
        %481 = vmatprep.subr.bf16.mxu0 0
        %482 = vmatpush1.bf16.msra.mxu0 0
        %483 = vmatprep.subr.bf16.mxu0 0
        %484 = vmatpush1.bf16.msra.mxu0 0
        %485 = vmatprep.subr.bf16.mxu0 0
        %486 = vmatpush1.bf16.msra.mxu0 0
        %487 = vmatprep.subr.bf16.mxu0 0
        %488 = vmatpush1.bf16.msra.mxu0 0
        %489 = vmatprep.subr.bf16.mxu0 0
        %490 = vmatpush1.bf16.msra.mxu0 0
        %491 = vmatprep.subr.bf16.mxu0 0
        %492 = vmatpush1.bf16.msra.mxu0 0
        %493 = vmatprep.subr.bf16.mxu0 0
        %494 = vmatpush1.bf16.msra.mxu0 0
        %495 = vmatprep.mubr.bf16.mxu0 0
        %496 = vmatmul.mubr.bf16.gmra.mrb[0].mxu0 %v461
        %v497 = vpop.f32.mrb[0].mxu0
        %v498 = vadd.f32 %v447, %v497
        %v499 = vpop.f32.mrb[0].mxu0
        %v500 = vpop.f32.mrb[0].mxu0
        %v501 = vpop.f32.mrb[0].mxu0
        %502 = vdwg.mxu0
        %v503 = vmax.f32 %v498, 0.0
        %v504 = vpack.c.bf16 %v503, %v503
        %v505 = vlaneseq
        %v506 = vshrl.u32 %v505, 7
        %v507 = vsub.s32 0, %v506
        %v508 = vrot.slane %v248, %v507
        %v513 = vunpack.c.l.b16 %v237
        %v514 = vunpack.c.l.b16 %v238
        %v515 = vunpack.c.l.b16 %v239
        %v516 = vunpack.c.l.b16 %v240
        %v517 = vpack.c.b16 %v514, %v513
        %v518 = vpack.c.b16 %v516, %v515
        %v522 = vsel %vm269, %v504, 0
        %524 = vmatprep.subr.bf16.mxu0 0
        %525 = vmatpush1.bf16.msra.mxu0 %v517
        %526 = vmatprep.subr.bf16.mxu0 0
        %527 = vmatpush1.bf16.msra.mxu0 %v518
        %528 = vmatprep.subr.bf16.mxu0 0
        %529 = vmatpush1.bf16.msra.mxu0 0
        %530 = vmatprep.subr.bf16.mxu0 0
        %531 = vmatpush1.bf16.msra.mxu0 0
        %532 = vmatprep.subr.bf16.mxu0 0
        %533 = vmatpush1.bf16.msra.mxu0 0
        %534 = vmatprep.subr.bf16.mxu0 0
        %535 = vmatpush1.bf16.msra.mxu0 0
        %536 = vmatprep.subr.bf16.mxu0 0
        %537 = vmatpush1.bf16.msra.mxu0 0
        %538 = vmatprep.subr.bf16.mxu0 0
        %539 = vmatpush1.bf16.msra.mxu0 0
        %540 = vmatprep.subr.bf16.mxu0 0
        %541 = vmatpush1.bf16.msra.mxu0 0
        %542 = vmatprep.subr.bf16.mxu0 0
        %543 = vmatpush1.bf16.msra.mxu0 0
        %544 = vmatprep.subr.bf16.mxu0 0
        %545 = vmatpush1.bf16.msra.mxu0 0
        %546 = vmatprep.subr.bf16.mxu0 0
        %547 = vmatpush1.bf16.msra.mxu0 0
        %548 = vmatprep.subr.bf16.mxu0 0
        %549 = vmatpush1.bf16.msra.mxu0 0
        %550 = vmatprep.subr.bf16.mxu0 0
        %551 = vmatpush1.bf16.msra.mxu0 0
        %552 = vmatprep.subr.bf16.mxu0 0
        %553 = vmatpush1.bf16.msra.mxu0 0
        %554 = vmatprep.subr.bf16.mxu0 0
        %555 = vmatpush1.bf16.msra.mxu0 0
        %556 = vmatprep.mubr.bf16.mxu0 0
        %557 = vmatmul.mubr.bf16.gmra.mrb[0].mxu0 %v522
        %v558 = vpop.f32.mrb[0].mxu0
        %v559 = vadd.f32 %v508, %v558
        %v560 = vpop.f32.mrb[0].mxu0
        %v561 = vpop.f32.mrb[0].mxu0
        %v562 = vpop.f32.mrb[0].mxu0
        %563 = vdwg.mxu0
        %vm564 = vcmask 23552
        %565 = vst.msk [vmem:[%s216] sm:$0xff] %vm564, %v559
        %p566 = scmp.lt.s32.totalorder %s19, 1
        %s567 = scalar_select %p566, %s19, 1
        %p568 = scmp.lt.s32.totalorder %s20, 1
        %s569 = scalar_select %p568, %s20, 1
        %s570 = smul.addr %s567, 2
        %s571 = sadd.s32 %s569, %s570
        %s572 = smul.addr %s571, 8
        %s573 = scalar_lea.vmem %s3, %s572
        // Predicated region
        $region37: #{base_fold_decoder_forward.1} parent=31 // pred_check
          %p574 = pneg %p120
        $region38: #{base_fold_decoder_forward.1} parent=31 // pred_check_branch
          %576 = sbr.rel (%p574) target = $region40
        $region39: #{base_fold_decoder_forward.1} parent=31 // pred_region
          _
        $region40: #{base_fold_decoder_forward.1} parent=31 // pred_fallthru
          _
      $region32: #{base_fold_decoder_forward.1} parent=5 // pred_fallthru
        _
      %p577 = scmp.le.s32.totalorder 2, %s10
      // Predicated region
      $region41: #{base_fold_decoder_forward.1} parent=5 // pred_check
        %p578 = pneg %p577
      $region42: #{base_fold_decoder_forward.1} parent=5 // pred_check_branch
        %580 = sbr.rel (%p578) target = $region44
      $region43: #{base_fold_decoder_forward.1} parent=5 // pred_region
        %s581 = ssub.s32 %s10, 2
        // Predicated region
        $region45: #{base_fold_decoder_forward.1} parent=43 // pred_check
          %p582 = pneg %p126
        $region46: #{base_fold_decoder_forward.1} parent=43 // pred_check_branch
          %584 = sbr.rel (%p582) target = $region48
        $region47: #{base_fold_decoder_forward.1} parent=43 // pred_region
          %p585 = scmp.lt.s32.totalorder %s21, 1
          %s586 = scalar_select %p585, %s21, 1
          %p587 = scmp.lt.s32.totalorder %s22, 1
          %s588 = scalar_select %p587, %s22, 1
          %s589 = smul.addr %s586, 2
          %s590 = sadd.s32 %s588, %s589
          %s591 = smul.addr %s590, 8
          %s592 = scalar_lea.vmem %s3, %s591
        $region48: #{base_fold_decoder_forward.1} parent=43 // pred_fallthru
          _
      $region44: #{base_fold_decoder_forward.1} parent=5 // pred_fallthru
        _
    $region6: #{base_fold_decoder_forward.1} parent=1 // loop_footer
      %s14 = sadd.s32 1, %s10
    $region7: #{base_fold_decoder_forward.1} parent=1 // loop_footer_branch
      %9 = sbr.rel target = $region3
    $region8: #{base_fold_decoder_forward.1} parent=1 // loop_exit
      _
    %593 = vsyncpa [#allocation3], 1
    %s594 = scalar_lea.sflag [#allocation3], 1
    %595 = vsyncpa %s594, 1

</llo_original>
